<compile_context>
chip_gen: v7x
topology: tpu7x:2x2x1
jax: 0.10.0
libtpu: 0.0.40
codegen_flags: <defaults>
</compile_context>

<pallas_src>
import numpy as np
import jax
import jax.numpy as jnp
from jax import lax
from jax.experimental import pallas as pl
from jax.experimental.pallas import tpu as pltpu

FOCAL_ALPHA = 0.25
FOCAL_GAMMA = 2          # integer-valued; power specialized to repeated multiply
LANES = 128
MAX_MATCHES = 128        # fixed bucket for matched-box shapes (jit-stable)


def _vmem_capacity_bytes():
    try:
        info = pltpu.get_tpu_info()
        cap = getattr(info, "vmem_capacity_bytes", None)
        if cap:
            return int(cap)
    except Exception:
        pass
    return 64 * 1024 * 1024   # conservative (v7x per-TC) fallback


# ----------------------------------------------------------------------------
# Fused token-sigmoid-focal-loss + cardinality kernel
#   output: (bs, 1, 128) resident accumulator; lane 0 = focal loss sum,
#           lane 1 = count of non-empty queries.
# ----------------------------------------------------------------------------
def _fused_focal_card_kernel(logits_ref, mask_ref, itv_ref, acc_ref):
    r = pl.program_id(1)

    x = logits_ref[0].astype(jnp.float32)      # (tile_r, T) upcast in-kernel
    m = mask_ref[0].astype(jnp.float32)        # (1, T) text mask, broadcasts over rows
    itv = itv_ref[0]                           # (tile_r, 2) int32 token interval / query
    beg = itv[:, 0:1]                          # (tile_r, 1)
    end = itv[:, 1:2]

    tile_r, T = x.shape
    col = lax.broadcasted_iota(jnp.int32, (tile_r, T), 1)

    # In-kernel one_hot: each matched query's positive map is a contiguous
    # token span [beg, end) (create_positive_map fills one span per label);
    # unmatched queries have beg == end == 0.
    t = jnp.logical_and(col >= beg, col < end).astype(jnp.float32)

    # ---- token sigmoid binary focal loss (masked sum) ----
    e = jnp.exp(-jnp.abs(x))                                 # single exp per element
    inv_1pe = pl.reciprocal(1.0 + e, approx=True)            # EUP slot
    p = jnp.where(x >= 0.0, inv_1pe, e * inv_1pe)            # sigmoid(x)
    ce = jnp.maximum(x, 0.0) - x * t + jnp.log(1.0 + e)      # BCE-with-logits
    p_t = p * t + (1.0 - p) * (1.0 - t)
    one_m = 1.0 - p_t
    mod = one_m
    for _ in range(FOCAL_GAMMA - 1):                         # (1 - p_t) ** gamma
        mod = mod * one_m
    alpha_t = FOCAL_ALPHA * t + (1.0 - FOCAL_ALPHA) * (1.0 - t)
    focal_sum = jnp.sum(alpha_t * ce * mod * m)

    # ---- cardinality: (argmax(logits, -1) != T-1) per query, reduced in-kernel ----
    # max over first T-1 tokens >= last token  <=>  first-occurrence argmax != T-1
    neg = jnp.float32(-jnp.inf)
    max_rest = jnp.max(jnp.where(col < T - 1, x, neg), axis=-1, keepdims=True)
    last = x[:, T - 1:T]                                     # direct lane slice
    card_sum = jnp.sum((max_rest >= last).astype(jnp.float32))

    lane = lax.broadcasted_iota(jnp.int32, (1, LANES), 1)
    contrib = (jnp.where(lane == 0, focal_sum, 0.0)
               + jnp.where(lane == 1, card_sum, 0.0))        # (1, 128) lane-dense

    @pl.when(r == 0)
    def _init():
        acc_ref[...] = jnp.zeros_like(acc_ref)

    acc_ref[0] = acc_ref[0] + contrib                        # resident accumulator


def _choose_tile_rows(nq, T, itemsize):
    """Largest row tile (divisor of nq, multiple of 8 or nq itself) whose
    double-buffered logits tile stays comfortably inside scoped VMEM.
    For GroundingDINO-sized problems this returns nq (grid collapses to (bs, 1))."""
    vmem_cap = _vmem_capacity_bytes()
    per_buf = min(max(vmem_cap // 16, 2 * 1024 * 1024), 16 * 1024 * 1024)
    cap = max(8, per_buf // max(T * itemsize, 1))
    if nq <= cap:
        return nq
    start = min(cap, nq)
    start -= start % 8
    for cand in range(start, 7, -8):
        if nq % cand == 0:
            return cand
    return nq   # fallback: full-nq block (always a legal block shape)


def fused_focal_cardinality(pred_logits, text_mask_b1t, tgt_intervals, tile_rows=None):
    bs, nq, T = pred_logits.shape
    if tile_rows is None:
        tile_rows = _choose_tile_rows(nq, T, pred_logits.dtype.itemsize)
    assert nq % tile_rows == 0, "tile_rows must divide nq"
    n_r = nq // tile_rows
    vmem_cap = _vmem_capacity_bytes()

    # NOTE(v7x): with bs >= 2 the leading "parallel" batch axis feeds both
    # TensorCores; for bs == 1 a row-tile split into 2 partial accumulators
    # would be needed to occupy the second TC.
    return pl.pallas_call(
        _fused_focal_card_kernel,
        out_shape=jax.ShapeDtypeStruct((bs, 1, LANES), jnp.float32),
        grid=(bs, n_r),
        in_specs=[
            pl.BlockSpec((1, tile_rows, T), lambda b, r: (b, r, 0)),   # logits (bf16 stream)
            pl.BlockSpec((1, 1, T), lambda b, r: (b, 0, 0)),           # text mask (bs,1,T)
            pl.BlockSpec((1, tile_rows, 2), lambda b, r: (b, r, 0)),   # token intervals
        ],
        out_specs=pl.BlockSpec((1, 1, LANES), lambda b, r: (b, 0, 0)), # per-batch accumulator
        compiler_params=pltpu.CompilerParams(
            dimension_semantics=("parallel", "arbitrary"),
            vmem_limit_bytes=min(vmem_cap * 3 // 4, 128 * 1024 * 1024)),
    )(pred_logits, text_mask_b1t, tgt_intervals)


# ----------------------------------------------------------------------------
# Box losses kernel (L1 total/xy/hw + GIoU sums)
#   input: single (8, Mpad) slab — rows 0..3 src (cx,cy,w,h), rows 4..7 tgt.
#   true match count passed as scalar prefetch (SMEM); output = (1,128) lanes.
# ----------------------------------------------------------------------------
def _box_losses_kernel(nm_ref, boxes_ref, out_ref):
    m = nm_ref[0]
    b = boxes_ref[...]                         # (8, Mpad)
    mp = b.shape[1]
    s, t = b[0:4, :], b[4:8, :]
    lane = lax.broadcasted_iota(jnp.int32, (1, mp), 1)
    v = (lane < m).astype(jnp.float32)         # validity from runtime match count
    eps = jnp.float32(1e-7)

    diff = jnp.abs(s - t) * v
    xy_sum = jnp.sum(diff[0:2, :])
    hw_sum = jnp.sum(diff[2:4, :])
    l1_sum = xy_sum + hw_sum                   # no third full reduction

    scx, scy, sw, sh = s[0:1, :], s[1:2, :], s[2:3, :], s[3:4, :]
    tcx, tcy, tw, th = t[0:1, :], t[1:2, :], t[2:3, :], t[3:4, :]
    sx0, sy0 = scx - 0.5 * sw, scy - 0.5 * sh
    sx1, sy1 = scx + 0.5 * sw, scy + 0.5 * sh
    tx0, ty0 = tcx - 0.5 * tw, tcy - 0.5 * th
    tx1, ty1 = tcx + 0.5 * tw, tcy + 0.5 * th

    area_s = (sx1 - sx0) * (sy1 - sy0)
    area_t = (tx1 - tx0) * (ty1 - ty0)
    iw = jnp.maximum(jnp.minimum(sx1, tx1) - jnp.maximum(sx0, tx0), 0.0)
    ih = jnp.maximum(jnp.minimum(sy1, ty1) - jnp.maximum(sy0, ty0), 0.0)
    inter = iw * ih
    union = area_s + area_t - inter
    iou = inter * pl.reciprocal(jnp.maximum(union, eps), approx=True)
    cw = jnp.maximum(sx1, tx1) - jnp.minimum(sx0, tx0)
    ch = jnp.maximum(sy1, ty1) - jnp.minimum(sy0, ty0)
    carea = cw * ch
    giou = iou - (carea - union) * pl.reciprocal(jnp.maximum(carea, eps), approx=True)
    giou_sum = jnp.sum(v * (1.0 - giou))

    out_lane = lax.broadcasted_iota(jnp.int32, (1, LANES), 1)
    out_ref[...] = (jnp.where(out_lane == 0, l1_sum, 0.0)
                    + jnp.where(out_lane == 1, giou_sum, 0.0)
                    + jnp.where(out_lane == 2, xy_sum, 0.0)
                    + jnp.where(out_lane == 3, hw_sum, 0.0))


def box_losses_sums(boxes_8xm, num_matches):
    mp = int(boxes_8xm.shape[1])
    nm = jnp.asarray([num_matches], dtype=jnp.int32)
    return pl.pallas_call(
        _box_losses_kernel,
        out_shape=jax.ShapeDtypeStruct((1, LANES), jnp.float32),
        grid_spec=pltpu.PrefetchScalarGridSpec(
            num_scalar_prefetch=1, grid=(1,),
            in_specs=[pl.BlockSpec((8, mp), lambda i, m: (0, 0))],
            out_specs=pl.BlockSpec((1, LANES), lambda i, m: (0, 0))),
        compiler_params=pltpu.CompilerParams(dimension_semantics=("arbitrary",)),
    )(nm, boxes_8xm)


# ----------------------------------------------------------------------------
# SetCriterion.forward (losses = ['labels', 'boxes', 'cardinality'])
# ----------------------------------------------------------------------------
def set_criterion_forward(pred_logits, pred_boxes, text_mask, tgt_token_intervals,
                          indices, target_boxes_list, target_labels_list,
                          tile_rows=None):
    bs, nq, T = pred_logits.shape

    num_boxes_list = [int(len(np.asarray(l))) for l in target_labels_list]
    # TODO(synk): torch.distributed.all_reduce(num_boxes) / get_world_size skipped (single host).
    num_boxes = max(float(sum(num_boxes_list)), 1.0)
    num_pos = max(float(sum(len(np.asarray(s)) for s, _ in indices)), 1.0)

    # Stream logits as bf16 (halves the only large HBM stream); f32 math in-kernel.
    if pred_logits.dtype == jnp.float32:
        pred_logits = pred_logits.astype(jnp.bfloat16)

    # ---- labels + cardinality: ONE fused pass over pred_logits ----
    mask_b1t = text_mask.astype(jnp.float32).reshape(bs, 1, T)        # tiny (bs*T)
    acc = fused_focal_cardinality(pred_logits, mask_b1t,
                                  tgt_token_intervals.astype(jnp.int32),
                                  tile_rows=tile_rows)                # (bs, 1, 128)
    loss_ce = jnp.sum(acc[:, 0, 0]) / num_pos
    card_pred = acc[:, 0, 1]                                          # (bs,)
    tgt_lengths = jnp.asarray(num_boxes_list, dtype=jnp.float32)
    cardinality_error = jnp.mean(jnp.abs(card_pred - tgt_lengths))

    # ---- boxes: gather matched pairs (host indices), fixed-size padded slab ----
    sizes = [len(np.asarray(s)) for s, _ in indices]
    M = int(sum(sizes))
    MP = MAX_MATCHES * max(1, int(np.ceil(max(M, 1) / MAX_MATCHES)))  # bucketed shape
    batch_idx = np.zeros(MP, np.int32)
    src_idx = np.zeros(MP, np.int32)
    off = 0
    for i, (s, _) in enumerate(indices):
        s = np.asarray(s, np.int32)
        batch_idx[off:off + len(s)] = i
        src_idx[off:off + len(s)] = s
        off += len(s)
    src_boxes = pred_boxes[batch_idx, src_idx].astype(jnp.float32)    # (MP, 4)
    if M > 0:
        tgt_cat = jnp.concatenate(
            [jnp.asarray(target_boxes_list[j])[np.asarray(t, np.int32)]
             for j, (_, t) in enumerate(indices)], axis=0).astype(jnp.float32)
    else:
        tgt_cat = jnp.zeros((0, 4), jnp.float32)
    tgt_boxes = jnp.pad(tgt_cat, ((0, MP - M), (0, 0)))
    boxes_8xm = jnp.concatenate([src_boxes.T, tgt_boxes.T], axis=0)   # (8, MP)

    sums = box_losses_sums(boxes_8xm, M)
    return {
        "loss_ce": loss_ce,
        "cardinality_error": cardinality_error,
        "loss_bbox": sums[0, 0] / num_boxes,
        "loss_giou": sums[0, 1] / num_boxes,
        "loss_xy": sums[0, 2] / num_boxes,
        "loss_hw": sums[0, 3] / num_boxes,
    }


# ----------------------------------------------------------------------------
# Pure-JAX reference (same math, no Pallas) for a numeric sanity check
# ----------------------------------------------------------------------------
def reference_losses(pred_logits, pred_boxes, text_mask, one_hot,
                     indices, target_boxes_list, target_labels_list):
    bs, nq, T = pred_logits.shape
    num_boxes_list = [int(len(np.asarray(l))) for l in target_labels_list]
    num_boxes = max(float(sum(num_boxes_list)), 1.0)
    num_pos = max(float(sum(len(np.asarray(s)) for s, _ in indices)), 1.0)

    x = pred_logits.astype(jnp.float32)
    t = one_hot.astype(jnp.float32)
    m = jnp.broadcast_to(text_mask[:, None, :], x.shape).astype(jnp.float32)
    p = 1.0 / (1.0 + jnp.exp(-x))
    ce = jnp.maximum(x, 0.0) - x * t + jnp.log(1.0 + jnp.exp(-jnp.abs(x)))
    p_t = p * t + (1.0 - p) * (1.0 - t)
    loss = ce * (1.0 - p_t) * (1.0 - p_t)
    alpha_t = FOCAL_ALPHA * t + (1.0 - FOCAL_ALPHA) * (1.0 - t)
    loss_ce = jnp.sum(alpha_t * loss * m) / num_pos

    card_pred = jnp.sum((jnp.argmax(x, axis=-1) != T - 1).astype(jnp.float32), axis=1)
    card_err = jnp.mean(jnp.abs(card_pred - jnp.asarray(num_boxes_list, jnp.float32)))

    batch_idx = np.concatenate(
        [np.full(len(np.asarray(s)), i, dtype=np.int32) for i, (s, _) in enumerate(indices)])
    src_idx = np.concatenate([np.asarray(s, dtype=np.int32) for s, _ in indices])
    sb = pred_boxes[batch_idx, src_idx].astype(jnp.float32)
    tb = jnp.concatenate(
        [jnp.asarray(target_boxes_list[j])[np.asarray(tt, np.int32)]
         for j, (_, tt) in enumerate(indices)], axis=0).astype(jnp.float32)
    diff = jnp.abs(sb - tb)

    def cxcywh_to_xyxy(b):
        cx, cy, w, h = b[:, 0], b[:, 1], b[:, 2], b[:, 3]
        return cx - 0.5 * w, cy - 0.5 * h, cx + 0.5 * w, cy + 0.5 * h

    sx0, sy0, sx1, sy1 = cxcywh_to_xyxy(sb)
    tx0, ty0, tx1, ty1 = cxcywh_to_xyxy(tb)
    area_s = (sx1 - sx0) * (sy1 - sy0)
    area_t = (tx1 - tx0) * (ty1 - ty0)
    inter = (jnp.maximum(jnp.minimum(sx1, tx1) - jnp.maximum(sx0, tx0), 0.0)
             * jnp.maximum(jnp.minimum(sy1, ty1) - jnp.maximum(sy0, ty0), 0.0))
    union = area_s + area_t - inter
    iou = inter / union
    carea = ((jnp.maximum(sx1, tx1) - jnp.minimum(sx0, tx0))
             * (jnp.maximum(sy1, ty1) - jnp.minimum(sy0, ty0)))
    giou = iou - (carea - union) / carea

    return {
        "loss_ce": loss_ce,
        "cardinality_error": card_err,
        "loss_bbox": jnp.sum(diff) / num_boxes,
        "loss_giou": jnp.sum(1.0 - giou) / num_boxes,
        "loss_xy": jnp.sum(diff[:, :2]) / num_boxes,
        "loss_hw": jnp.sum(diff[:, 2:]) / num_boxes,
    }


# ----------------------------------------------------------------------------
# Driver
# ----------------------------------------------------------------------------
if __name__ == "__main__":
    key = jax.random.PRNGKey(0)
    bs, nq, T = 2, 32, 256          # 256 text tokens (hardcoded in create_positive_map)
    num_cats = [4, 5]               # categories per caption
    num_tgts = [3, 5]               # ground-truth boxes per image

    k1, k2, k3 = jax.random.split(key, 3)
    # model emits f32; streamed as bf16 — both Pallas path and reference consume
    # the SAME bf16 values so the comparison is apples-to-apples.
    pred_logits = jax.random.normal(k1, (bs, nq, T), jnp.float32).astype(jnp.bfloat16)
    pred_boxes = jax.nn.sigmoid(jax.random.normal(k2, (bs, nq, 4), jnp.float32))

    # text mask: first 24 tokens are real text tokens
    text_mask = jnp.zeros((bs, T), dtype=bool).at[:, :24].set(True)

    # target labels / boxes
    target_labels_list = [np.array([0, 1, 2], np.int32),
                          np.array([1, 3, 0, 4, 2], np.int32)]
    target_boxes_list = []
    for j in range(bs):
        kj = jax.random.fold_in(k3, j)
        c = jax.random.uniform(kj, (num_tgts[j], 2), minval=0.2, maxval=0.8)
        wh = jax.random.uniform(jax.random.fold_in(kj, 1), (num_tgts[j], 2),
                                minval=0.05, maxval=0.3)
        target_boxes_list.append(jnp.concatenate([c, wh], axis=1).astype(jnp.float32))

    # TODO(synk): create_positive_map needs a HuggingFace tokenizer (char_to_token);
    # replaced by a deterministic synthetic positive map: label l -> tokens [4l, 4l+4).
    label_spans = [[(4 * l, 4 * l + 4) for l in range(num_cats[j])] for j in range(bs)]

    # TODO(synk): Hungarian matcher (scipy linear_sum_assignment) has no Pallas
    # equivalent; using a deterministic identity matching (query i <-> target i).
    indices = [(np.arange(num_tgts[j], dtype=np.int32),
                np.arange(num_tgts[j], dtype=np.int32)) for j in range(bs)]

    # Dense one_hot (reference only) and the compact per-query token intervals the
    # kernel consumes: one_hot[i, src] = label_map[labels[tgt]], each label_map
    # row being a single contiguous token span (exactly what create_positive_map fills).
    one_hot_np = np.zeros((bs, nq, T), np.float32)
    intervals_np = np.zeros((bs, nq, 2), np.int32)
    for i in range(bs):
        src, tgt = indices[i]
        tgt_ids = np.asarray(target_labels_list[i])[tgt]
        for q, lab in zip(src, tgt_ids):
            b0, e0 = label_spans[i][int(lab)]
            intervals_np[i, q] = (b0, e0)
            one_hot_np[i, q, b0:e0] = 1.0
    one_hot = jnp.asarray(one_hot_np)
    intervals = jnp.asarray(intervals_np)

    losses = set_criterion_forward(pred_logits, pred_boxes, text_mask, intervals,
                                   indices, target_boxes_list, target_labels_list)
    losses = {k: jax.block_until_ready(v) for k, v in losses.items()}

    ref = reference_losses(pred_logits, pred_boxes, text_mask, one_hot,
                           indices, target_boxes_list, target_labels_list)
    for k in losses:
        np.testing.assert_allclose(np.asarray(losses[k]), np.asarray(ref[k]),
                                   rtol=2e-2, atol=5e-3)

    print("KERNEL_OK")
</pallas_src>

<mosaic_0001>
module attributes {stable_mosaic.version = 11 : i64} {
  func.func @_fused_focal_card_kernel(%arg0: i32, %arg1: i32, %arg2: memref<1x32x256xbf16, #tpu.memory_space<vmem>>, %arg3: memref<1x1x256xf32, #tpu.memory_space<vmem>>, %arg4: memref<1x32x2xi32, #tpu.memory_space<vmem>>, %arg5: memref<1x1x128xf32, #tpu.memory_space<vmem>>) attributes {dimension_semantics = [#tpu.dimension_semantics<parallel>, #tpu.dimension_semantics<arbitrary>], iteration_bounds = array<i64: 2, 1>, scalar_prefetch = 0 : i64, scratch_operands = 0 : i64, tpu.core_type = #tpu.core_type<tc>, window_params = [{transform_indices = @transform_0, window_bounds = array<i64: 1, 32, 256>}, {transform_indices = @transform_1, window_bounds = array<i64: 1, 1, 256>}, {transform_indices = @transform_2, window_bounds = array<i64: 1, 32, 2>}, {transform_indices = @transform_3, window_bounds = array<i64: 1, 1, 128>}]} {
    %c0 = arith.constant 0 : index
    %c0_0 = arith.constant 0 : index
    %c0_1 = arith.constant 0 : index
    %0 = vector.load %arg2[%c0, %c0_0, %c0_1] : memref<1x32x256xbf16, #tpu.memory_space<vmem>>, vector<1x32x256xbf16>
    %1 = vector.shape_cast %0 : vector<1x32x256xbf16> to vector<32x256xbf16>
    %2 = arith.extf %1 : vector<32x256xbf16> to vector<32x256xf32>
    %c0_2 = arith.constant 0 : index
    %c0_3 = arith.constant 0 : index
    %c0_4 = arith.constant 0 : index
    %3 = vector.load %arg3[%c0_2, %c0_3, %c0_4] : memref<1x1x256xf32, #tpu.memory_space<vmem>>, vector<1x1x256xf32>
    %4 = vector.shape_cast %3 : vector<1x1x256xf32> to vector<1x256xf32>
    %c0_5 = arith.constant 0 : index
    %c0_6 = arith.constant 0 : index
    %c0_7 = arith.constant 0 : index
    %5 = vector.load %arg4[%c0_5, %c0_6, %c0_7] : memref<1x32x2xi32, #tpu.memory_space<vmem>>, vector<1x32x2xi32>
    %6 = vector.shape_cast %5 : vector<1x32x2xi32> to vector<32x2xi32>
    %7 = vector.extract_strided_slice %6 {offsets = [0, 0], sizes = [32, 1], strides = [1, 1]} : vector<32x2xi32> to vector<32x1xi32>
    %8 = vector.extract_strided_slice %6 {offsets = [0, 1], sizes = [32, 1], strides = [1, 1]} : vector<32x2xi32> to vector<32x1xi32>
    %9 = tpu.iota {dimensions = array<i32: 1>} : vector<32x256xi32>
    %10 = vector.broadcast %7 : vector<32x1xi32> to vector<32x256xi32>
    %11 = arith.cmpi sge, %9, %10 : vector<32x256xi32>
    %12 = vector.broadcast %8 : vector<32x1xi32> to vector<32x256xi32>
    %13 = arith.cmpi slt, %9, %12 : vector<32x256xi32>
    %14 = arith.andi %11, %13 : vector<32x256xi1>
    %15 = arith.extui %14 : vector<32x256xi1> to vector<32x256xi32>
    %16 = arith.sitofp %15 : vector<32x256xi32> to vector<32x256xf32>
    %17 = math.absf %2 : vector<32x256xf32>
    %cst = arith.constant 0.000000e+00 : f32
    %18 = vector.broadcast %cst : f32 to vector<32x256xf32>
    %19 = arith.subf %18, %17 : vector<32x256xf32>
    %20 = math.exp %19 : vector<32x256xf32>
    %cst_8 = arith.constant 1.000000e+00 : f32
    %21 = vector.broadcast %cst_8 : f32 to vector<32x256xf32>
    %22 = arith.addf %21, %20 : vector<32x256xf32>
    %23 = tpu.reciprocal %22 {approx = true} : vector<32x256xf32> -> vector<32x256xf32>
    %cst_9 = arith.constant 0.000000e+00 : f32
    %24 = vector.broadcast %cst_9 : f32 to vector<32x256xf32>
    %25 = arith.cmpf oge, %2, %24 : vector<32x256xf32>
    %26 = arith.mulf %20, %23 : vector<32x256xf32>
    %27 = arith.select %25, %23, %26 : vector<32x256xi1>, vector<32x256xf32>
    %cst_10 = arith.constant 0.000000e+00 : f32
    %28 = vector.broadcast %cst_10 : f32 to vector<32x256xf32>
    %29 = arith.maximumf %2, %28 : vector<32x256xf32>
    %30 = arith.mulf %2, %16 : vector<32x256xf32>
    %31 = arith.subf %29, %30 : vector<32x256xf32>
    %cst_11 = arith.constant 1.000000e+00 : f32
    %32 = vector.broadcast %cst_11 : f32 to vector<32x256xf32>
    %33 = arith.addf %32, %20 : vector<32x256xf32>
    %34 = math.log %33 : vector<32x256xf32>
    %35 = arith.addf %31, %34 : vector<32x256xf32>
    %36 = arith.mulf %27, %16 : vector<32x256xf32>
    %cst_12 = arith.constant 1.000000e+00 : f32
    %37 = vector.broadcast %cst_12 : f32 to vector<32x256xf32>
    %38 = arith.subf %37, %27 : vector<32x256xf32>
    %cst_13 = arith.constant 1.000000e+00 : f32
    %39 = vector.broadcast %cst_13 : f32 to vector<32x256xf32>
    %40 = arith.subf %39, %16 : vector<32x256xf32>
    %41 = arith.mulf %38, %40 : vector<32x256xf32>
    %42 = arith.addf %36, %41 : vector<32x256xf32>
    %cst_14 = arith.constant 1.000000e+00 : f32
    %43 = vector.broadcast %cst_14 : f32 to vector<32x256xf32>
    %44 = arith.subf %43, %42 : vector<32x256xf32>
    %45 = arith.mulf %44, %44 : vector<32x256xf32>
    %cst_15 = arith.constant 2.500000e-01 : f32
    %46 = vector.broadcast %cst_15 : f32 to vector<32x256xf32>
    %47 = arith.mulf %46, %16 : vector<32x256xf32>
    %cst_16 = arith.constant 1.000000e+00 : f32
    %48 = vector.broadcast %cst_16 : f32 to vector<32x256xf32>
    %49 = arith.subf %48, %16 : vector<32x256xf32>
    %cst_17 = arith.constant 7.500000e-01 : f32
    %50 = vector.broadcast %cst_17 : f32 to vector<32x256xf32>
    %51 = arith.mulf %50, %49 : vector<32x256xf32>
    %52 = arith.addf %47, %51 : vector<32x256xf32>
    %53 = arith.mulf %52, %35 : vector<32x256xf32>
    %54 = arith.mulf %53, %45 : vector<32x256xf32>
    %55 = vector.broadcast %4 : vector<1x256xf32> to vector<32x256xf32>
    %56 = arith.mulf %54, %55 : vector<32x256xf32>
    %57 = vector.shape_cast %56 : vector<32x256xf32> to vector<1x32x256xf32>
    %cst_18 = arith.constant dense<0.000000e+00> : vector<1xf32>
    %58 = vector.multi_reduction <add>, %57, %cst_18 [1, 2] : vector<1x32x256xf32> to vector<1xf32>
    %59 = vector.shape_cast %58 : vector<1xf32> to vector<1x1x1xf32>
    %60 = vector.extract %59[0, 0, 0] : f32 from vector<1x1x1xf32>
    %c255_i32 = arith.constant 255 : i32
    %61 = vector.broadcast %c255_i32 : i32 to vector<32x256xi32>
    %62 = arith.cmpi slt, %9, %61 : vector<32x256xi32>
    %cst_19 = arith.constant 0xFF800000 : f32
    %63 = vector.broadcast %cst_19 : f32 to vector<32x256xf32>
    %64 = arith.select %62, %2, %63 : vector<32x256xi1>, vector<32x256xf32>
    %cst_20 = arith.constant dense<0xFF800000> : vector<32xf32>
    %65 = vector.multi_reduction <maximumf>, %64, %cst_20 [1] : vector<32x256xf32> to vector<32xf32>
    %66 = vector.shape_cast %65 : vector<32xf32> to vector<32x1xf32>
    %67 = vector.extract_strided_slice %2 {offsets = [0, 255], sizes = [32, 1], strides = [1, 1]} : vector<32x256xf32> to vector<32x1xf32>
    %68 = arith.cmpf oge, %66, %67 : vector<32x1xf32>
    %69 = arith.extui %68 : vector<32x1xi1> to vector<32x1xi32>
    %70 = arith.sitofp %69 : vector<32x1xi32> to vector<32x1xf32>
    %71 = vector.shape_cast %70 : vector<32x1xf32> to vector<1x32x1xf32>
    %cst_21 = arith.constant dense<0.000000e+00> : vector<1xf32>
    %72 = vector.multi_reduction <add>, %71, %cst_21 [1, 2] : vector<1x32x1xf32> to vector<1xf32>
    %73 = vector.shape_cast %72 : vector<1xf32> to vector<1x1x1xf32>
    %74 = vector.extract %73[0, 0, 0] : f32 from vector<1x1x1xf32>
    %75 = tpu.iota {dimensions = array<i32: 1>} : vector<1x128xi32>
    %c0_i32 = arith.constant 0 : i32
    %76 = vector.broadcast %c0_i32 : i32 to vector<1x128xi32>
    %77 = arith.cmpi eq, %75, %76 : vector<1x128xi32>
    %cst_22 = arith.constant 0.000000e+00 : f32
    %78 = vector.broadcast %60 : f32 to vector<1x128xf32>
    %79 = vector.broadcast %cst_22 : f32 to vector<1x128xf32>
    %80 = arith.select %77, %78, %79 : vector<1x128xi1>, vector<1x128xf32>
    %c1_i32 = arith.constant 1 : i32
    %81 = vector.broadcast %c1_i32 : i32 to vector<1x128xi32>
    %82 = arith.cmpi eq, %75, %81 : vector<1x128xi32>
    %cst_23 = arith.constant 0.000000e+00 : f32
    %83 = vector.broadcast %74 : f32 to vector<1x128xf32>
    %84 = vector.broadcast %cst_23 : f32 to vector<1x128xf32>
    %85 = arith.select %82, %83, %84 : vector<1x128xi1>, vector<1x128xf32>
    %86 = arith.addf %80, %85 : vector<1x128xf32>
    %c0_i32_24 = arith.constant 0 : i32
    %87 = arith.cmpi eq, %arg1, %c0_i32_24 : i32
    %88 = arith.extui %87 : i1 to i32
    %c0_i32_25 = arith.constant 0 : i32
    %89 = arith.cmpi ne, %88, %c0_i32_25 : i32
    scf.if %89 {
      %cst_32 = arith.constant 0.000000e+00 : f32
      %96 = vector.broadcast %cst_32 : f32 to vector<1x1x128xf32>
      %c0_33 = arith.constant 0 : index
      %c0_34 = arith.constant 0 : index
      %c0_35 = arith.constant 0 : index
      %97 = vector.load %arg5[%c0_33, %c0_34, %c0_35] : memref<1x1x128xf32, #tpu.memory_space<vmem>>, vector<1x1x128xf32>
      tpu.vector_store %arg5[%c0_33, %c0_34, %c0_35], %96 {strides = array<i32>} : memref<1x1x128xf32, #tpu.memory_space<vmem>>, vector<1x1x128xf32>,
    } else {
    }
    %c0_26 = arith.constant 0 : index
    %c0_27 = arith.constant 0 : index
    %c0_28 = arith.constant 0 : index
    %90 = vector.load %arg5[%c0_26, %c0_27, %c0_28] : memref<1x1x128xf32, #tpu.memory_space<vmem>>, vector<1x1x128xf32>
    %91 = vector.shape_cast %90 : vector<1x1x128xf32> to vector<1x128xf32>
    %92 = arith.addf %91, %86 : vector<1x128xf32>
    %c0_29 = arith.constant 0 : index
    %c0_30 = arith.constant 0 : index
    %c0_31 = arith.constant 0 : index
    %93 = vector.load %arg5[%c0_29, %c0_30, %c0_31] : memref<1x1x128xf32, #tpu.memory_space<vmem>>, vector<1x1x128xf32>
    %94 = vector.shape_cast %93 : vector<1x1x128xf32> to vector<1x128xf32>
    %95 = vector.shape_cast %92 : vector<1x128xf32> to vector<1x1x128xf32>
    tpu.vector_store %arg5[%c0_29, %c0_30, %c0_31], %95 {strides = array<i32>} : memref<1x1x128xf32, #tpu.memory_space<vmem>>, vector<1x1x128xf32>,
    return
  }
  func.func @transform_0(%arg0: i32, %arg1: i32) -> (i32, i32, i32) {
    %c0_i32 = arith.constant 0 : i32
    %c0_i32_0 = arith.constant 0 : i32
    return %arg0, %arg1, %c0_i32 : i32, i32, i32
  }
  func.func @transform_1(%arg0: i32, %arg1: i32) -> (i32, i32, i32) {
    %c0_i32 = arith.constant 0 : i32
    %c0_i32_0 = arith.constant 0 : i32
    %c0_i32_1 = arith.constant 0 : i32
    return %arg0, %c0_i32, %c0_i32_0 : i32, i32, i32
  }
  func.func @transform_2(%arg0: i32, %arg1: i32) -> (i32, i32, i32) {
    %c0_i32 = arith.constant 0 : i32
    %c0_i32_0 = arith.constant 0 : i32
    return %arg0, %arg1, %c0_i32 : i32, i32, i32
  }
  func.func @transform_3(%arg0: i32, %arg1: i32) -> (i32, i32, i32) {
    %c0_i32 = arith.constant 0 : i32
    %c0_i32_0 = arith.constant 0 : i32
    %c0_i32_1 = arith.constant 0 : i32
    return %arg0, %c0_i32, %c0_i32_0 : i32, i32, i32
  }
}

</mosaic_0001>

<llo_original>
// kernel: tpu_custom_call.1
$region0: #{tpu_custom_call.1}
  #allocation0 [shape = 'u32[]', space=smem, size = 0x4, offset = 0x4, fixed_abs, tag = 'smem constant byte address 0x4 - core index']
  #allocation1 [shape = 'u32[144,128]{1,0:T(1,128)}', space=vmem, size = 0x12000, scoped, tag = 'internal scratch']
  %s0 = inlined_call_operand.vmem [shape: bf16[2,32,256], index: 0, kind: input, shape index: {}]
  %s1 = inlined_call_operand.vmem [shape: f32[2,1,256], index: 1, kind: input, shape index: {}]
  %s2 = inlined_call_operand.vmem [shape: s32[2,32,2], index: 2, kind: input, shape index: {}]
  %s3 = inlined_call_operand.hbm [shape: f32[2,1,128], index: 3, kind: output, shape index: {}]
  %s4 = sld [smem:[#allocation0]]
  $region49: #{tpu_custom_call.1} parent=0
    _
  %s6 = ssub.s32 1, %s4
  %s7 = scalar_select 0, %s6, %s4
  $region1: #{tpu_custom_call.1} parent=0
    #allocation2 [shape = 'u8[1024]{0}', space=vmem, size = 0x400, scoped, tag = 'output window, operand 0']
    #allocation3 [shape = 's32[2]{0}', space=sflag, size = 0x8, scoped, tag = 'scoped memory for tpu_custom_call.1']
    %8 = vsyncpa [#allocation3], 0
    %s9 = scalar_lea.sflag [#allocation3], 1
    %10 = vsyncpa %s9, 0
    loop: start=0, step=1, limit=4
    $region2: #{tpu_custom_call.1} parent=1 // loop_pre_header
      _
    $region3: #{tpu_custom_call.1} parent=1 // loop_header
      %s12 = sphi 0, %s16
      %p13 = scmp.ge.s32.totalorder %s12, 4
      %s19 = sphi 0, %s31
      %s20 = sphi 0, %s27
      %s21 = sphi 0, %s19
      %s22 = sphi 0, %s20
      %s23 = sphi 0, %s21
      %s24 = sphi 0, %s22
      %s36 = sphi 0, %s38
      %s39 = sphi 0, %s36
      %s40 = sphi 0, %s39
      %s56 = sphi 0, %s40
      %s62 = sphi 0, %s64
      %s65 = sphi 0, %s62
      %s66 = sphi 0, %s65
      %s82 = sphi 0, %s66
      %s90 = sphi 0, %s92
      %s93 = sphi 0, %s90
      %s94 = sphi 0, %s93
      %s110 = sphi 0, %s94
      %s116 = sphi 0, %s118
      %s119 = sphi 0, %s116
      %s120 = sphi 0, %s119
      %s136 = sphi 0, %s120
    $region4: #{tpu_custom_call.1} parent=1 // loop_header_branch
      %15 = sbr.rel (%p13) target = $region8
    $region5: #{tpu_custom_call.1} parent=1 // loop_body
      %s17 = ssub.s32 %s12, 1
      %s18 = ssub.s32 %s12, 2
      %s25 = sadd.s32 1, %s20
      %p26 = scmp.ge.s32.totalorder %s25, 1
      %s27 = scalar_select %p26, 0, %s25
      %s28 = sadd.s32 1, %s19
      %s29 = scalar_select %p26, %s28, %s19
      %p30 = scmp.ge.s32.totalorder %s29, 2
      %s31 = scalar_select %p30, 0, %s29
      %s32 = ssub.s32 %s19, %s31
      %s33 = ssub.s32 %s20, %s27
      %s34 = sor.u32 %s32, %s33
      %p35 = scmp.eq.s32.totalorder %s34, 0
      %s37 = sadd.s32 %s36, 1
      %s38 = scalar_select %p35, %s36, %s37
      %p41 = pneg %p35
      %p42 = scmp.eq.s32.totalorder %s12, 1
      %p43 = por %p41, %p42
      %p44 = scmp.ne.s32.totalorder %s36, %s39
      %p45 = scmp.eq.s32.totalorder %s12, 0
      %p46 = por %p44, %p45
      %p47 = scmp.ne.s32.totalorder %s36, %s39
      %p48 = scmp.eq.s32.totalorder %s17, 1
      %p49 = por %p47, %p48
      %p50 = scmp.ne.s32.totalorder %s39, %s40
      %p51 = scmp.eq.s32.totalorder %s17, 0
      %p52 = por %p50, %p51
      %p53 = scmp.ne.s32.totalorder %s39, %s40
      %p54 = scmp.eq.s32.totalorder %s18, 1
      %p55 = por %p53, %p54
      %p57 = scmp.ne.s32.totalorder %s40, %s56
      %p58 = scmp.eq.s32.totalorder %s18, 0
      %p59 = por %p57, %p58
      %s60 = ssub.s32 %s19, %s31
      %p61 = scmp.eq.s32.totalorder %s60, 0
      %s63 = sadd.s32 %s62, 1
      %s64 = scalar_select %p61, %s62, %s63
      %p67 = pneg %p61
      %p68 = scmp.eq.s32.totalorder %s12, 1
      %p69 = por %p67, %p68
      %p70 = scmp.ne.s32.totalorder %s62, %s65
      %p71 = scmp.eq.s32.totalorder %s12, 0
      %p72 = por %p70, %p71
      %p73 = scmp.ne.s32.totalorder %s62, %s65
      %p74 = scmp.eq.s32.totalorder %s17, 1
      %p75 = por %p73, %p74
      %p76 = scmp.ne.s32.totalorder %s65, %s66
      %p77 = scmp.eq.s32.totalorder %s17, 0
      %p78 = por %p76, %p77
      %p79 = scmp.ne.s32.totalorder %s65, %s66
      %p80 = scmp.eq.s32.totalorder %s18, 1
      %p81 = por %p79, %p80
      %p83 = scmp.ne.s32.totalorder %s66, %s82
      %p84 = scmp.eq.s32.totalorder %s18, 0
      %p85 = por %p83, %p84
      %s86 = ssub.s32 %s19, %s31
      %s87 = ssub.s32 %s20, %s27
      %s88 = sor.u32 %s86, %s87
      %p89 = scmp.eq.s32.totalorder %s88, 0
      %s91 = sadd.s32 %s90, 1
      %s92 = scalar_select %p89, %s90, %s91
      %p95 = pneg %p89
      %p96 = scmp.eq.s32.totalorder %s12, 1
      %p97 = por %p95, %p96
      %p98 = scmp.ne.s32.totalorder %s90, %s93
      %p99 = scmp.eq.s32.totalorder %s12, 0
      %p100 = por %p98, %p99
      %p101 = scmp.ne.s32.totalorder %s90, %s93
      %p102 = scmp.eq.s32.totalorder %s17, 1
      %p103 = por %p101, %p102
      %p104 = scmp.ne.s32.totalorder %s93, %s94
      %p105 = scmp.eq.s32.totalorder %s17, 0
      %p106 = por %p104, %p105
      %p107 = scmp.ne.s32.totalorder %s93, %s94
      %p108 = scmp.eq.s32.totalorder %s18, 1
      %p109 = por %p107, %p108
      %p111 = scmp.ne.s32.totalorder %s94, %s110
      %p112 = scmp.eq.s32.totalorder %s18, 0
      %p113 = por %p111, %p112
      %s114 = ssub.s32 %s19, %s31
      %p115 = scmp.eq.s32.totalorder %s114, 0
      %s117 = sadd.s32 %s116, 1
      %s118 = scalar_select %p115, %s116, %s117
      %p121 = pneg %p115
      %p122 = scmp.eq.s32.totalorder %s12, 1
      %p123 = por %p121, %p122
      %p124 = scmp.ne.s32.totalorder %s116, %s119
      %p125 = scmp.eq.s32.totalorder %s12, 0
      %p126 = por %p124, %p125
      %p127 = scmp.ne.s32.totalorder %s116, %s119
      %p128 = scmp.eq.s32.totalorder %s17, 1
      %p129 = por %p127, %p128
      %p130 = scmp.ne.s32.totalorder %s119, %s120
      %p131 = scmp.eq.s32.totalorder %s17, 0
      %p132 = por %p130, %p131
      %p133 = scmp.ne.s32.totalorder %s119, %s120
      %p134 = scmp.eq.s32.totalorder %s18, 1
      %p135 = por %p133, %p134
      %p137 = scmp.ne.s32.totalorder %s120, %s136
      %p138 = scmp.eq.s32.totalorder %s18, 0
      %p139 = por %p137, %p138
      %p140 = scmp.le.s32.totalorder 1, %s12
      %p141 = scmp.lt.s32.totalorder %s12, 3
      %p142 = pnand %p140, %p141
      %p143 = pneg %p142
      // Predicated region
      $region9: #{tpu_custom_call.1} parent=5 // pred_check
        _
      $region10: #{tpu_custom_call.1} parent=5 // pred_check_branch
        %145 = sbr.rel (%p142) target = $region12
      $region11: #{tpu_custom_call.1} parent=5 // pred_region
        %s146 = ssub.s32 %s12, 1
      $region12: #{tpu_custom_call.1} parent=5 // pred_fallthru
        _
      %p147 = scmp.lt.s32.totalorder %s12, 2
      // Predicated region
      $region13: #{tpu_custom_call.1} parent=5 // pred_check
        %p148 = pneg %p147
      $region14: #{tpu_custom_call.1} parent=5 // pred_check_branch
        %150 = sbr.rel (%p148) target = $region16
      $region15: #{tpu_custom_call.1} parent=5 // pred_region
        // Predicated region
        $region17: #{tpu_custom_call.1} parent=15 // pred_check
          %p151 = pneg %p46
        $region18: #{tpu_custom_call.1} parent=15 // pred_check_branch
          %153 = sbr.rel (%p151) target = $region20
        $region19: #{tpu_custom_call.1} parent=15 // pred_region
          %s154 = smul.u32 4, %s20
          %p155 = scmp.lt.s32.totalorder %s19, 1
          %s156 = scalar_select %p155, %s19, 1
          %p157 = scmp.lt.s32.totalorder %s154, 3
          %s158 = scalar_select %p157, %s154, 3
          %s159 = smul.addr %s158, 2
          %s160 = smul.addr %s156, 8
          %s161 = sadd.s32 %s159, %s160
          %s162 = smul.addr %s161, 4
          %s163 = scalar_lea.vmem %s0, %s162
          %s164 = smul.u32 4, %s20
        $region20: #{tpu_custom_call.1} parent=15 // pred_fallthru
          _
        // Predicated region
        $region21: #{tpu_custom_call.1} parent=15 // pred_check
          %p165 = pneg %p72
        $region22: #{tpu_custom_call.1} parent=15 // pred_check_branch
          %167 = sbr.rel (%p165) target = $region24
        $region23: #{tpu_custom_call.1} parent=15 // pred_region
          %p168 = scmp.lt.s32.totalorder %s19, 1
          %s169 = scalar_select %p168, %s19, 1
          %s170 = smul.addr %s169, 2
          %s171 = scalar_lea.vmem %s1, %s170
        $region24: #{tpu_custom_call.1} parent=15 // pred_fallthru
          _
        // Predicated region
        $region25: #{tpu_custom_call.1} parent=15 // pred_check
          %p172 = pneg %p100
        $region26: #{tpu_custom_call.1} parent=15 // pred_check_branch
          %174 = sbr.rel (%p172) target = $region28
        $region27: #{tpu_custom_call.1} parent=15 // pred_region
          %s175 = smul.u32 4, %s20
          %p176 = scmp.lt.s32.totalorder %s19, 1
          %s177 = scalar_select %p176, %s19, 1
          %p178 = scmp.lt.s32.totalorder %s175, 3
          %s179 = scalar_select %p178, %s175, 3
          %s180 = smul.addr %s177, 4
          %s181 = sadd.s32 %s179, %s180
          %s182 = smul.addr %s181, 8
          %s183 = scalar_lea.vmem %s2, %s182
          %s184 = smul.u32 4, %s20
        $region28: #{tpu_custom_call.1} parent=15 // pred_fallthru
          _
      $region16: #{tpu_custom_call.1} parent=5 // pred_fallthru
        _
      %p185 = scmp.le.s32.totalorder 1, %s12
      %p186 = scmp.lt.s32.totalorder %s12, 3
      %p187 = pnand %p185, %p186
      %p188 = pneg %p187
      // Predicated region
      $region29: #{tpu_custom_call.1} parent=5 // pred_check
        _
      $region30: #{tpu_custom_call.1} parent=5 // pred_check_branch
        %190 = sbr.rel (%p187) target = $region32
      $region31: #{tpu_custom_call.1} parent=5 // pred_region
        %s191 = ssub.s32 %s12, 1
        %s192 = smul.u32 4, %s22
        %p193 = scmp.lt.s32.totalorder %s21, 1
        %s194 = scalar_select %p193, %s21, 1
        %p195 = scmp.lt.s32.totalorder %s192, 3
        %s196 = scalar_select %p195, %s192, 3
        %s197 = smul.addr %s196, 2
        %s198 = smul.addr %s194, 8
        %s199 = sadd.s32 %s197, %s198
        %s200 = smul.addr %s199, 4
        %s201 = scalar_lea.vmem %s0, %s200
        %p202 = pneg %p52
        %p203 = pneg %p49
        %p204 = scmp.lt.s32.totalorder %s21, 1
        %s205 = scalar_select %p204, %s21, 1
        %s206 = smul.addr %s205, 2
        %s207 = scalar_lea.vmem %s1, %s206
        %p208 = pneg %p78
        %p209 = pneg %p75
        %s210 = smul.u32 4, %s22
        %p211 = scmp.lt.s32.totalorder %s21, 1
        %s212 = scalar_select %p211, %s21, 1
        %p213 = scmp.lt.s32.totalorder %s210, 3
        %s214 = scalar_select %p213, %s210, 3
        %s215 = smul.addr %s212, 4
        %s216 = sadd.s32 %s214, %s215
        %s217 = smul.addr %s216, 8
        %s218 = scalar_lea.vmem %s2, %s217
        %p219 = pneg %p106
        %p220 = pneg %p103
        %p221 = pneg %p132
        %p222 = pneg %p129
        %s223 = sand.u32 %s119, 1
        %s224 = scalar_lea.sflag [#allocation3], %s223
        %s225 = sand.u32 %s119, 1
        %s226 = scalar_lea.vmem [#allocation2], %s225
        %s227 = smul.u32 4, %s22
        %p228 = scmp.lt.s32.totalorder %s21, 1
        %s229 = scalar_select %p228, %s21, 1
        %p230 = scmp.lt.s32.totalorder %s227, 3
        %s231 = scalar_select %p230, %s227, 3
        %s232 = smul.addr %s231, 2
        %s233 = smul.addr %s229, 8
        %s234 = sadd.s32 %s232, %s233
        %s235 = smul.addr %s234, 4
        %s236 = scalar_lea.vmem %s0, %s235
        %s237 = smul.u32 4, %s22
        %p238 = scmp.lt.s32.totalorder %s21, 1
        %s239 = scalar_select %p238, %s21, 1
        %s240 = smul.addr %s239, 2
        %s241 = scalar_lea.vmem %s1, %s240
        %s242 = smul.u32 4, %s22
        %p243 = scmp.lt.s32.totalorder %s21, 1
        %s244 = scalar_select %p243, %s21, 1
        %p245 = scmp.lt.s32.totalorder %s242, 3
        %s246 = scalar_select %p245, %s242, 3
        %s247 = smul.addr %s244, 4
        %s248 = sadd.s32 %s246, %s247
        %s249 = smul.addr %s248, 8
        %s250 = scalar_lea.vmem %s2, %s249
        %s251 = smul.u32 4, %s22
        %v252 = vld [vmem:[%s236] sm:$0xff]
        %v253 = vld [vmem:[%s236 + $0x8] sm:$0xff]
        %v254 = vld [vmem:[%s236 + $0x10] sm:$0xff]
        %v255 = vld [vmem:[%s236 + $0x18] sm:$0xff]
        %v256 = vunpack.c.l.bf16 %v252
        %v257 = vunpack.c.h.bf16 %v252
        %v258 = vunpack.c.l.bf16 %v253
        %v259 = vunpack.c.h.bf16 %v253
        %v260 = vunpack.c.l.bf16 %v254
        %v261 = vunpack.c.h.bf16 %v254
        %v262 = vunpack.c.l.bf16 %v255
        %v263 = vunpack.c.h.bf16 %v255
        %v264 = vld [vmem:[%s241] sm:$0x3]
        %v265 = vld [vmem:[%s250] sm:$0xff]
        %v266 = vld [vmem:[%s250 + $0x8] sm:$0xff]
        %v267 = vld [vmem:[%s250 + $0x10] sm:$0xff]
        %v268 = vld [vmem:[%s250 + $0x18] sm:$0xff]
        %v269 = vlaneseq
        %v270 = vand.u32 %v269, 127
        %v271 = vadd.s32 %v270, 128
        %272 = vset.pattern.permute.xlu0 0
        %273 = vperm.xlu0 %272, %v265
        %v274 = vpop.permute.xlu0 %273
        %275 = vset.pattern.permute.xlu0 0
        %276 = vperm.xlu0 %275, %v266
        %v277 = vpop.permute.xlu0 %276
        %278 = vset.pattern.permute.xlu0 0
        %279 = vperm.xlu0 %278, %v267
        %v280 = vpop.permute.xlu0 %279
        %281 = vset.pattern.permute.xlu0 0
        %282 = vperm.xlu0 %281, %v268
        %v283 = vpop.permute.xlu0 %282
        %vm284 = vcmp.ge.s32.totalorder %v270, %v274
        %vm285 = vcmp.ge.s32.totalorder %v271, %v274
        %vm286 = vcmp.ge.s32.totalorder %v270, %v277
        %vm287 = vcmp.ge.s32.totalorder %v271, %v277
        %vm288 = vcmp.ge.s32.totalorder %v270, %v280
        %vm289 = vcmp.ge.s32.totalorder %v271, %v280
        %vm290 = vcmp.ge.s32.totalorder %v270, %v283
        %vm291 = vcmp.ge.s32.totalorder %v271, %v283
        %292 = vset.pattern.permute.xlu0 1
        %293 = vperm.xlu0 %292, %v265
        %v294 = vpop.permute.xlu0 %293
        %295 = vset.pattern.permute.xlu0 1
        %296 = vperm.xlu0 %295, %v266
        %v297 = vpop.permute.xlu0 %296
        %298 = vset.pattern.permute.xlu0 1
        %299 = vperm.xlu0 %298, %v267
        %v300 = vpop.permute.xlu0 %299
        %301 = vset.pattern.permute.xlu0 1
        %302 = vperm.xlu0 %301, %v268
        %v303 = vpop.permute.xlu0 %302
        %vm304 = vcmp.lt.s32.totalorder %v270, %v294
        %vm305 = vcmp.lt.s32.totalorder %v271, %v294
        %vm306 = vcmp.lt.s32.totalorder %v270, %v297
        %vm307 = vcmp.lt.s32.totalorder %v271, %v297
        %vm308 = vcmp.lt.s32.totalorder %v270, %v300
        %vm309 = vcmp.lt.s32.totalorder %v271, %v300
        %vm310 = vcmp.lt.s32.totalorder %v270, %v303
        %vm311 = vcmp.lt.s32.totalorder %v271, %v303
        %vm312 = vmand %vm284, %vm304
        %vm313 = vmand %vm285, %vm305
        %vm314 = vmand %vm286, %vm306
        %vm315 = vmand %vm287, %vm307
        %vm316 = vmand %vm288, %vm308
        %vm317 = vmand %vm289, %vm309
        %vm318 = vmand %vm290, %vm310
        %vm319 = vmand %vm291, %vm311
        %v320 = vsel %vm312, 1, 0
        %v321 = vsel %vm313, 1, 0
        %v322 = vsel %vm314, 1, 0
        %v323 = vsel %vm315, 1, 0
        %v324 = vsel %vm316, 1, 0
        %v325 = vsel %vm317, 1, 0
        %v326 = vsel %vm318, 1, 0
        %v327 = vsel %vm319, 1, 0
        %v328 = vcvt.s32.f32 %v320
        %v329 = vcvt.s32.f32 %v321
        %v330 = vcvt.s32.f32 %v322
        %v331 = vcvt.s32.f32 %v323
        %v332 = vcvt.s32.f32 %v324
        %v333 = vcvt.s32.f32 %v325
        %v334 = vcvt.s32.f32 %v326
        %v335 = vcvt.s32.f32 %v327
        %v336 = vand.u32 2147483647, %v256
        %v337 = vand.u32 2147483647, %v257
        %v338 = vand.u32 2147483647, %v258
        %v339 = vand.u32 2147483647, %v259
        %v340 = vand.u32 2147483647, %v260
        %v341 = vand.u32 2147483647, %v261
        %v342 = vand.u32 2147483647, %v262
        %v343 = vand.u32 2147483647, %v263
        %v344 = vsub.f32 0.0, %v336
        %v345 = vsub.f32 0.0, %v337
        %v346 = vsub.f32 0.0, %v338
        %v347 = vsub.f32 0.0, %v339
        %v348 = vsub.f32 0.0, %v340
        %v349 = vsub.f32 0.0, %v341
        %v350 = vsub.f32 0.0, %v342
        %v351 = vsub.f32 0.0, %v343
        %v352 = vmul.f32 %v344, 1.442695
        %v353 = vpow.pop %v352
        %v354 = vmul.f32 %v345, 1.442695
        %v355 = vpow.pop %v354
        %v356 = vmul.f32 %v346, 1.442695
        %v357 = vpow.pop %v356
        %v358 = vmul.f32 %v347, 1.442695
        %v359 = vpow.pop %v358
        %v360 = vmul.f32 %v348, 1.442695
        %v361 = vpow.pop %v360
        %v362 = vmul.f32 %v349, 1.442695
        %v363 = vpow.pop %v362
        %v364 = vmul.f32 %v350, 1.442695
        %v365 = vpow.pop %v364
        %v366 = vmul.f32 %v351, 1.442695
        %v367 = vpow.pop %v366
        %v368 = vadd.f32 %v353, 1.0
        %v369 = vadd.f32 %v355, 1.0
        %v370 = vadd.f32 %v357, 1.0
        %v371 = vadd.f32 %v359, 1.0
        %v372 = vadd.f32 %v361, 1.0
        %v373 = vadd.f32 %v363, 1.0
        %v374 = vadd.f32 %v365, 1.0
        %v375 = vadd.f32 %v367, 1.0
        %v376 = vrcp.pop %v368
        %v377 = vrcp.pop %v369
        %v378 = vrcp.pop %v370
        %v379 = vrcp.pop %v371
        %v380 = vrcp.pop %v372
        %v381 = vrcp.pop %v373
        %v382 = vrcp.pop %v374
        %v383 = vrcp.pop %v375
        %vm384 = vcmp.ge.f32.partialorder %v256, 0.0
        %vm385 = vcmp.ge.f32.partialorder %v257, 0.0
        %vm386 = vcmp.ge.f32.partialorder %v258, 0.0
        %vm387 = vcmp.ge.f32.partialorder %v259, 0.0
        %vm388 = vcmp.ge.f32.partialorder %v260, 0.0
        %vm389 = vcmp.ge.f32.partialorder %v261, 0.0
        %vm390 = vcmp.ge.f32.partialorder %v262, 0.0
        %vm391 = vcmp.ge.f32.partialorder %v263, 0.0
        %v392 = vmul.f32 %v353, %v376
        %v393 = vmul.f32 %v355, %v377
        %v394 = vmul.f32 %v357, %v378
        %v395 = vmul.f32 %v359, %v379
        %v396 = vmul.f32 %v361, %v380
        %v397 = vmul.f32 %v363, %v381
        %v398 = vmul.f32 %v365, %v382
        %v399 = vmul.f32 %v367, %v383
        %v400 = vsel %vm384, %v376, %v392
        %v401 = vsel %vm385, %v377, %v393
        %v402 = vsel %vm386, %v378, %v394
        %v403 = vsel %vm387, %v379, %v395
        %v404 = vsel %vm388, %v380, %v396
        %v405 = vsel %vm389, %v381, %v397
        %v406 = vsel %vm390, %v382, %v398
        %v407 = vsel %vm391, %v383, %v399
        %v408 = vmax.f32 %v256, 0.0
        %v409 = vmax.f32 %v257, 0.0
        %v410 = vmax.f32 %v258, 0.0
        %v411 = vmax.f32 %v259, 0.0
        %v412 = vmax.f32 %v260, 0.0
        %v413 = vmax.f32 %v261, 0.0
        %v414 = vmax.f32 %v262, 0.0
        %v415 = vmax.f32 %v263, 0.0
        %v416 = vmul.f32 %v256, %v328
        %v417 = vmul.f32 %v257, %v329
        %v418 = vmul.f32 %v258, %v330
        %v419 = vmul.f32 %v259, %v331
        %v420 = vmul.f32 %v260, %v332
        %v421 = vmul.f32 %v261, %v333
        %v422 = vmul.f32 %v262, %v334
        %v423 = vmul.f32 %v263, %v335
        %v424 = vsub.f32 %v408, %v416
        %v425 = vsub.f32 %v409, %v417
        %v426 = vsub.f32 %v410, %v418
        %v427 = vsub.f32 %v411, %v419
        %v428 = vsub.f32 %v412, %v420
        %v429 = vsub.f32 %v413, %v421
        %v430 = vsub.f32 %v414, %v422
        %v431 = vsub.f32 %v415, %v423
        %v432 = vlog2.pop %v368
        %v433 = vmul.f32 %v432, 0.6931472
        %v434 = vlog2.pop %v369
        %v435 = vmul.f32 %v434, 0.6931472
        %v436 = vlog2.pop %v370
        %v437 = vmul.f32 %v436, 0.6931472
        %v438 = vlog2.pop %v371
        %v439 = vmul.f32 %v438, 0.6931472
        %v440 = vlog2.pop %v372
        %v441 = vmul.f32 %v440, 0.6931472
        %v442 = vlog2.pop %v373
        %v443 = vmul.f32 %v442, 0.6931472
        %v444 = vlog2.pop %v374
        %v445 = vmul.f32 %v444, 0.6931472
        %v446 = vlog2.pop %v375
        %v447 = vmul.f32 %v446, 0.6931472
        %v448 = vadd.f32 %v424, %v433
        %v449 = vadd.f32 %v425, %v435
        %v450 = vadd.f32 %v426, %v437
        %v451 = vadd.f32 %v427, %v439
        %v452 = vadd.f32 %v428, %v441
        %v453 = vadd.f32 %v429, %v443
        %v454 = vadd.f32 %v430, %v445
        %v455 = vadd.f32 %v431, %v447
        %v456 = vmul.f32 %v400, %v328
        %v457 = vmul.f32 %v401, %v329
        %v458 = vmul.f32 %v402, %v330
        %v459 = vmul.f32 %v403, %v331
        %v460 = vmul.f32 %v404, %v332
        %v461 = vmul.f32 %v405, %v333
        %v462 = vmul.f32 %v406, %v334
        %v463 = vmul.f32 %v407, %v335
        %v464 = vsub.f32 1.0, %v400
        %v465 = vsub.f32 1.0, %v401
        %v466 = vsub.f32 1.0, %v402
        %v467 = vsub.f32 1.0, %v403
        %v468 = vsub.f32 1.0, %v404
        %v469 = vsub.f32 1.0, %v405
        %v470 = vsub.f32 1.0, %v406
        %v471 = vsub.f32 1.0, %v407
        %v472 = vsub.f32 1.0, %v328
        %v473 = vsub.f32 1.0, %v329
        %v474 = vsub.f32 1.0, %v330
        %v475 = vsub.f32 1.0, %v331
        %v476 = vsub.f32 1.0, %v332
        %v477 = vsub.f32 1.0, %v333
        %v478 = vsub.f32 1.0, %v334
        %v479 = vsub.f32 1.0, %v335
        %v480 = vmul.f32 %v464, %v472
        %v481 = vmul.f32 %v465, %v473
        %v482 = vmul.f32 %v466, %v474
        %v483 = vmul.f32 %v467, %v475
        %v484 = vmul.f32 %v468, %v476
        %v485 = vmul.f32 %v469, %v477
        %v486 = vmul.f32 %v470, %v478
        %v487 = vmul.f32 %v471, %v479
        %v488 = vadd.f32 %v456, %v480
        %v489 = vadd.f32 %v457, %v481
        %v490 = vadd.f32 %v458, %v482
        %v491 = vadd.f32 %v459, %v483
        %v492 = vadd.f32 %v460, %v484
        %v493 = vadd.f32 %v461, %v485
        %v494 = vadd.f32 %v462, %v486
        %v495 = vadd.f32 %v463, %v487
        %v496 = vsub.f32 1.0, %v488
        %v497 = vsub.f32 1.0, %v489
        %v498 = vsub.f32 1.0, %v490
        %v499 = vsub.f32 1.0, %v491
        %v500 = vsub.f32 1.0, %v492
        %v501 = vsub.f32 1.0, %v493
        %v502 = vsub.f32 1.0, %v494
        %v503 = vsub.f32 1.0, %v495
        %v504 = vmul.f32 %v496, %v496
        %v505 = vmul.f32 %v497, %v497
        %v506 = vmul.f32 %v498, %v498
        %v507 = vmul.f32 %v499, %v499
        %v508 = vmul.f32 %v500, %v500
        %v509 = vmul.f32 %v501, %v501
        %v510 = vmul.f32 %v502, %v502
        %v511 = vmul.f32 %v503, %v503
        %v512 = vmul.f32 %v328, 0.25
        %v513 = vmul.f32 %v329, 0.25
        %v514 = vmul.f32 %v330, 0.25
        %v515 = vmul.f32 %v331, 0.25
        %v516 = vmul.f32 %v332, 0.25
        %v517 = vmul.f32 %v333, 0.25
        %v518 = vmul.f32 %v334, 0.25
        %v519 = vmul.f32 %v335, 0.25
        %v520 = vmul.f32 %v472, 0.75
        %v521 = vmul.f32 %v473, 0.75
        %v522 = vmul.f32 %v474, 0.75
        %v523 = vmul.f32 %v475, 0.75
        %v524 = vmul.f32 %v476, 0.75
        %v525 = vmul.f32 %v477, 0.75
        %v526 = vmul.f32 %v478, 0.75
        %v527 = vmul.f32 %v479, 0.75
        %v528 = vadd.f32 %v512, %v520
        %v529 = vadd.f32 %v513, %v521
        %v530 = vadd.f32 %v514, %v522
        %v531 = vadd.f32 %v515, %v523
        %v532 = vadd.f32 %v516, %v524
        %v533 = vadd.f32 %v517, %v525
        %v534 = vadd.f32 %v518, %v526
        %v535 = vadd.f32 %v519, %v527
        %v536 = vmul.f32 %v528, %v448
        %v537 = vmul.f32 %v529, %v449
        %v538 = vmul.f32 %v530, %v450
        %v539 = vmul.f32 %v531, %v451
        %v540 = vmul.f32 %v532, %v452
        %v541 = vmul.f32 %v533, %v453
        %v542 = vmul.f32 %v534, %v454
        %v543 = vmul.f32 %v535, %v455
        %v544 = vmul.f32 %v536, %v504
        %v545 = vmul.f32 %v537, %v505
        %v546 = vmul.f32 %v538, %v506
        %v547 = vmul.f32 %v539, %v507
        %v548 = vmul.f32 %v540, %v508
        %v549 = vmul.f32 %v541, %v509
        %v550 = vmul.f32 %v542, %v510
        %v551 = vmul.f32 %v543, %v511
        %v553 = vlaneseq
        %v554 = vshrl.u32 %v553, 7
        %v555 = vsub.s32 0, %v554
        %v556 = vrot.slane %v264, %v555
        %v557 = vlaneseq
        %v558 = vshrl.u32 %v557, 7
        %v559 = vsub.s32 1, %v558
        %v560 = vrot.slane %v264, %v559
        %v563 = vmul.f32 %v544, %v556
        %v564 = vmul.f32 %v545, %v560
        %v565 = vmul.f32 %v546, %v556
        %v566 = vmul.f32 %v547, %v560
        %v567 = vmul.f32 %v548, %v556
        %v568 = vmul.f32 %v549, %v560
        %v569 = vmul.f32 %v550, %v556
        %v570 = vmul.f32 %v551, %v560
        %v571 = vadd.f32 %v563, %v564
        %v572 = vadd.f32 %v571, %v565
        %v573 = vadd.f32 %v572, %v566
        %v574 = vadd.f32 %v573, %v567
        %v575 = vadd.f32 %v574, %v568
        %v576 = vadd.f32 %v575, %v569
        %v577 = vadd.f32 %v576, %v570
        %578 = vadd.xlane.f32.xlu0 %v577
        %v579 = vpop.xlane.xlu0 %578
        %v580 = vrot.slane %v579, 4
        %v581 = vadd.f32 %v579, %v580
        %v582 = vrot.slane %v581, 2
        %v583 = vadd.f32 %v581, %v582
        %v584 = vrot.slane %v583, 1
        %v585 = vadd.f32 %v583, %v584
        %s586 = vtos %v585
        %vm587 = vcmp.lt.s32.totalorder %v270, 255
        %vm588 = vcmp.lt.s32.totalorder %v271, 255
        %v589 = vsel %vm587, %v256, -inf
        %v590 = vsel %vm588, %v257, -inf
        %v591 = vsel %vm587, %v258, -inf
        %v592 = vsel %vm588, %v259, -inf
        %v593 = vsel %vm587, %v260, -inf
        %v594 = vsel %vm588, %v261, -inf
        %v595 = vsel %vm587, %v262, -inf
        %v596 = vsel %vm588, %v263, -inf
        %v597 = vmax.f32 %v589, %v590
        %598 = vmax.xlane.f32.xlu0 %v597
        %v599 = vpop.xlane.xlu0 %598
        %v600 = vmax.f32 %v591, %v592
        %601 = vmax.xlane.f32.xlu0 %v600
        %v602 = vpop.xlane.xlu0 %601
        %v603 = vmax.f32 %v593, %v594
        %604 = vmax.xlane.f32.xlu0 %v603
        %v605 = vpop.xlane.xlu0 %604
        %v606 = vmax.f32 %v595, %v596
        %607 = vmax.xlane.f32.xlu0 %v606
        %v608 = vpop.xlane.xlu0 %607
        %vm609 = vcmp.ge.f32.partialorder %v599, %v257
        %vm610 = vcmp.ge.f32.partialorder %v602, %v259
        %vm611 = vcmp.ge.f32.partialorder %v605, %v261
        %vm612 = vcmp.ge.f32.partialorder %v608, %v263
        %v613 = vsel %vm609, 1, 0
        %v614 = vsel %vm610, 1, 0
        %v615 = vsel %vm611, 1, 0
        %v616 = vsel %vm612, 1, 0
        %v617 = vcvt.s32.f32 %v613
        %v618 = vcvt.s32.f32 %v614
        %v619 = vcvt.s32.f32 %v615
        %v620 = vcvt.s32.f32 %v616
        %625 = vrot.lane.b32.xlu0 %v617, 1
        %v626 = vpop.permute.xlu0 %625
        %627 = vrot.lane.b32.xlu0 %v618, 1
        %v628 = vpop.permute.xlu0 %627
        %629 = vrot.lane.b32.xlu0 %v619, 1
        %v630 = vpop.permute.xlu0 %629
        %631 = vrot.lane.b32.xlu0 %v620, 1
        %v632 = vpop.permute.xlu0 %631
        %vm637 = vcmask 7168
        %v638 = vsel %vm637, %v626, 0.0
        %v639 = vsel %vm637, %v628, 0.0
        %v640 = vadd.f32 %v638, %v639
        %v641 = vsel %vm637, %v630, 0.0
        %v642 = vadd.f32 %v640, %v641
        %v643 = vsel %vm637, %v632, 0.0
        %v644 = vadd.f32 %v642, %v643
        %645 = vadd.xlane.f32.xlu0 %v644
        %v646 = vpop.xlane.xlu0 %645
        %v647 = vrot.slane %v646, 4
        %v648 = vadd.f32 %v646, %v647
        %v649 = vrot.slane %v648, 2
        %v650 = vadd.f32 %v648, %v649
        %v651 = vrot.slane %v650, 1
        %v652 = vadd.f32 %v650, %v651
        %s653 = vtos %v652
        %vm654 = vcmp.eq.s32.totalorder %v270, 0
        %v655 = vstv %s586
        %v656 = vsel %vm654, %v655, 0.0
        %vm657 = vcmp.eq.s32.totalorder %v270, 1
        %v658 = vstv %s653
        %v659 = vsel %vm657, %v658, 0.0
        %v660 = vadd.f32 %v656, %v659
        %p661 = scmp.eq.s32.totalorder %s22, 0
        // Predicated region
        $region33: #{tpu_custom_call.1} parent=31 // pred_check
          %p662 = pneg %p661
        $region34: #{tpu_custom_call.1} parent=31 // pred_check_branch
          %664 = sbr.rel (%p662) target = $region36
        $region35: #{tpu_custom_call.1} parent=31 // pred_region
          %665 = vst [vmem:[%s226] sm:$0x1] 0.0
        $region36: #{tpu_custom_call.1} parent=31 // pred_fallthru
          _
        %v666 = vld [vmem:[%s226] sm:$0x1]
        %v667 = vadd.f32 %v666, %v660
        %668 = vst [vmem:[%s226] sm:$0x1] %v667
        %s669 = sand.u32 %s119, 1
        %s670 = scalar_lea.sflag [#allocation3], %s669
        %s671 = sand.u32 %s119, 1
        %s672 = scalar_lea.vmem [#allocation2], %s671
        // Predicated region
        $region37: #{tpu_custom_call.1} parent=31 // pred_check
          %p673 = pneg %p129
        $region38: #{tpu_custom_call.1} parent=31 // pred_check_branch
          %675 = sbr.rel (%p673) target = $region40
        $region39: #{tpu_custom_call.1} parent=31 // pred_region
          %s677 = ssub.s32 16, 16
          %678 = vsyncadd %s670, %s677
          %s679 = smul.addr %s21, 16
          %s680 = scalar_lea.hbm %s3, %s679
          %s682 = sshll.u32 %s672, 4
          %s683 = int_to_ptr.vmem [resolvable:$true] %s682
          %685 = dma.vmem_to_hbm [thread:$0]  %s683, 16, %s680, %s670
        $region40: #{tpu_custom_call.1} parent=31 // pred_fallthru
          _
      $region32: #{tpu_custom_call.1} parent=5 // pred_fallthru
        _
      %p686 = scmp.le.s32.totalorder 2, %s12
      // Predicated region
      $region41: #{tpu_custom_call.1} parent=5 // pred_check
        %p687 = pneg %p686
      $region42: #{tpu_custom_call.1} parent=5 // pred_check_branch
        %689 = sbr.rel (%p687) target = $region44
      $region43: #{tpu_custom_call.1} parent=5 // pred_region
        %s690 = ssub.s32 %s12, 2
        // Predicated region
        $region45: #{tpu_custom_call.1} parent=43 // pred_check
          %p691 = pneg %p135
        $region46: #{tpu_custom_call.1} parent=43 // pred_check_branch
          %693 = sbr.rel (%p691) target = $region48
        $region47: #{tpu_custom_call.1} parent=43 // pred_region
          %s694 = sand.u32 %s120, 1
          %s695 = scalar_lea.sflag [#allocation3], %s694
          %s696 = sand.u32 %s120, 1
          %s697 = scalar_lea.vmem [#allocation2], %s696
          %698 = dma.done %s695, 16
        $region48: #{tpu_custom_call.1} parent=43 // pred_fallthru
          _
      $region44: #{tpu_custom_call.1} parent=5 // pred_fallthru
        _
    $region6: #{tpu_custom_call.1} parent=1 // loop_footer
      %s16 = sadd.s32 1, %s12
    $region7: #{tpu_custom_call.1} parent=1 // loop_footer_branch
      %11 = sbr.rel target = $region3
    $region8: #{tpu_custom_call.1} parent=1 // loop_exit
      _
    %699 = vsyncpa [#allocation3], 1
    %s700 = scalar_lea.sflag [#allocation3], 1
    %701 = vsyncpa %s700, 1

</llo_original>
